<compile_context>
chip_gen: v7x
topology: tpu7x:2x2x1
jax: 0.10.0
libtpu: 0.0.40
codegen_flags: <defaults>
</compile_context>

<pallas_src>
import functools
import math

import jax
import jax.numpy as jnp
from jax.experimental import pallas as pl
from jax.experimental.pallas import tpu as pltpu


ACT_DTYPE = jnp.bfloat16            # MXU inputs / stored activations
_LOGIT_PAD = 128                    # lane-dense classifier output slab


def _tpu_constants():
    """VMEM budget + tile targets, selected per TPU generation."""
    vmem_phys = 64 * 1024 * 1024
    try:
        info = pltpu.get_tpu_info()
        vmem_phys = int(getattr(info, "vmem_capacity_bytes", vmem_phys))
    except Exception:
        pass
    if vmem_phys >= 100 * 1024 * 1024:        # v5e / v6e (128 MiB VMEM)
        return {"vmem_limit": 96 * 1024 * 1024, "tm": 512, "tq": 256, "tk": 512}
    # v7x (64 MiB VMEM, 2 TCs) or unknown: be conservative.
    return {"vmem_limit": 48 * 1024 * 1024, "tm": 256, "tq": 128, "tk": 256}


_CONST = _tpu_constants()


def _pick_tile(dim, target, align):
    """Largest tile <= target that divides dim and is a multiple of `align`.
    Falls back to the full dim (block == full array dim is always legal)."""
    if dim <= target:
        return dim
    t = (target // align) * align
    while t >= align:
        if dim % t == 0:
            return t
        t -= align
    return dim


# ----------------------------- Pallas kernels -----------------------------

def _linear_kernel(x_ref, w_ref, b_ref, o_ref, *, act):
    """y = x @ w + b (full-K block, no reduction grid axis)."""
    y = jnp.dot(x_ref[...], w_ref[...], preferred_element_type=jnp.float32)
    y = y + b_ref[...].astype(jnp.float32)
    if act == "gelu":
        y = jax.nn.gelu(y, approximate=False)    # exact (erf) GELU, HF-BERT parity
    elif act == "tanh":
        y = jnp.tanh(y)
    o_ref[...] = y.astype(o_ref.dtype)


def _qkv_kernel(x_ref, w_ref, b_ref, q_out, k_out, v_out, *, H, heads, q_scale):
    """Fused QKV projection against the concatenated (H, 3H) weight.
    Emits HEAD-MAJOR (heads, TM, Dh) outputs (relayout once per tile, not per kv step);
    1/sqrt(Dh) is folded into Q."""
    y = jnp.dot(x_ref[...], w_ref[...], preferred_element_type=jnp.float32)
    y = y + b_ref[...].astype(jnp.float32)
    TM = y.shape[0]
    Dh = H // heads

    def head_major(z):                            # (TM, H) -> (heads, TM, Dh)
        return z.reshape(TM, heads, Dh).swapaxes(0, 1)

    q_out[...] = (head_major(y[:, :H]) * q_scale).astype(q_out.dtype)
    k_out[...] = head_major(y[:, H:2 * H]).astype(k_out.dtype)
    v_out[...] = head_major(y[:, 2 * H:3 * H]).astype(v_out.dtype)


def _linear_res_ln_kernel(x_ref, w_ref, b_ref, r_ref, g_ref, bt_ref, o_ref, *, eps):
    """y = LayerNorm(x @ w + b + residual): fused projection epilogue (f32 stats)."""
    y = jnp.dot(x_ref[...], w_ref[...], preferred_element_type=jnp.float32)
    y = y + b_ref[...].astype(jnp.float32) + r_ref[...].astype(jnp.float32)
    mu = jnp.mean(y, axis=-1, keepdims=True)
    yc = y - mu
    var = jnp.mean(yc * yc, axis=-1, keepdims=True)
    inv = jax.lax.rsqrt(var + eps)
    o_ref[...] = (yc * inv * g_ref[...] + bt_ref[...]).astype(o_ref.dtype)


def _embed_ln_kernel(x_ref, pos_ref, g_ref, b_ref, o_ref, *, eps):
    """Fused positional-embedding add + LayerNorm (saves one (M,H) HBM round trip)."""
    x = x_ref[0].astype(jnp.float32) + pos_ref[...].astype(jnp.float32)
    mu = jnp.mean(x, axis=-1, keepdims=True)
    xc = x - mu
    var = jnp.mean(xc * xc, axis=-1, keepdims=True)
    inv = jax.lax.rsqrt(var + eps)
    o_ref[0] = (xc * inv * g_ref[...] + b_ref[...]).astype(o_ref.dtype)


def _flash_attn_kernel(q_ref, k_ref, v_ref, amask_ref, o_ref, m_sc, l_sc, acc_sc):
    """Flash-style multi-head attention on HEAD-MAJOR inputs.
    Blocks: q (heads, TQ, Dh), k/v (heads, TK, Dh), mask (1, 1, TK).
    Grid (B * q_tiles, kv_tiles), kv last + "arbitrary"; online-softmax state
    (m, l, acc) lives in VMEM scratch; never materializes an (S, S) score block in HBM."""
    ki = pl.program_id(1)

    @pl.when(ki == 0)
    def _():
        m_sc[...] = jnp.full_like(m_sc, -1e30)
        l_sc[...] = jnp.zeros_like(l_sc)
        acc_sc[...] = jnp.zeros_like(acc_sc)

    q = q_ref[...]                                        # (heads, TQ, Dh) bf16
    k = k_ref[...]
    v = v_ref[...]
    heads, TQ, Dh = q.shape

    # q already carries the 1/sqrt(Dh) scale (folded into the QKV projection).
    s = jnp.einsum("hqd,hkd->hqk", q, k,
                   preferred_element_type=jnp.float32)    # (heads, TQ, TK)
    s = s + amask_ref[0]                                  # (1, TK) broadcast

    m_new = jnp.maximum(m_sc[...], jnp.max(s, axis=-1, keepdims=True))
    alpha = jnp.exp(m_sc[...] - m_new)
    p = jnp.exp(s - m_new)                                # f32 exp: reference parity
    l_sc[...] = alpha * l_sc[...] + jnp.sum(p, axis=-1, keepdims=True)
    acc_sc[...] = alpha * acc_sc[...] + jnp.einsum(
        "hqk,hkd->hqd", p.astype(v.dtype), v, preferred_element_type=jnp.float32)
    m_sc[...] = m_new

    @pl.when(ki == pl.num_programs(1) - 1)
    def _():
        out = acc_sc[...] / l_sc[...]                     # exact f32 divide
        # Head-major -> (TQ, H) lane-dense store; once per (b, q-tile), not per kv step.
        o_ref[...] = out.swapaxes(0, 1).reshape(TQ, heads * Dh).astype(o_ref.dtype)


def _head_kernel(cls_ref, pw_ref, pb_ref, cw_ref, cb_ref, o_ref):
    """Fused [CLS] pooler (tanh) + classifier; lane-dense padded logits; f32 throughout."""
    pooled = jnp.tanh(
        jnp.dot(cls_ref[...], pw_ref[...], preferred_element_type=jnp.float32)
        + pb_ref[...].astype(jnp.float32))
    logits = jnp.dot(pooled, cw_ref[...],
                     preferred_element_type=jnp.float32) + cb_ref[...]
    o_ref[...] = logits


# ----------------------------- pallas_call wrappers -----------------------------

def linear(x, w, b, act="none"):
    M, K = x.shape
    N = w.shape[1]
    TM = _pick_tile(M, _CONST["tm"], 16)
    TN = _pick_tile(N, 512, 128)
    grid = (M // TM, N // TN)
    return pl.pallas_call(
        functools.partial(_linear_kernel, act=act),
        out_shape=jax.ShapeDtypeStruct((M, N), ACT_DTYPE),
        grid=grid,
        in_specs=[
            pl.BlockSpec((TM, K), lambda i, j: (i, 0)),   # invariant across j: no re-DMA
            pl.BlockSpec((K, TN), lambda i, j: (0, j)),
            pl.BlockSpec((1, TN), lambda i, j: (0, j)),
        ],
        out_specs=pl.BlockSpec((TM, TN), lambda i, j: (i, j)),
        compiler_params=pltpu.CompilerParams(
            dimension_semantics=("parallel", "parallel"),
            vmem_limit_bytes=_CONST["vmem_limit"]),
    )(x, w, b.reshape(1, N))


def qkv_proj(x, w_qkv, b_qkv, H, heads):
    M, K = x.shape
    N3 = w_qkv.shape[1]
    Dh = H // heads
    TM = _pick_tile(M, _CONST["tm"], 16)
    grid = (M // TM,)
    q_scale = 1.0 / math.sqrt(Dh)
    out_sds = jax.ShapeDtypeStruct((heads, M, Dh), ACT_DTYPE)
    out_spec = pl.BlockSpec((heads, TM, Dh), lambda i: (0, i, 0))
    return pl.pallas_call(
        functools.partial(_qkv_kernel, H=H, heads=heads, q_scale=q_scale),
        out_shape=(out_sds, out_sds, out_sds),
        grid=grid,
        in_specs=[
            pl.BlockSpec((TM, K), lambda i: (i, 0)),
            pl.BlockSpec((K, N3), lambda i: (0, 0)),
            pl.BlockSpec((1, N3), lambda i: (0, 0)),
        ],
        out_specs=(out_spec, out_spec, out_spec),
        compiler_params=pltpu.CompilerParams(
            dimension_semantics=("parallel",),
            vmem_limit_bytes=_CONST["vmem_limit"]),
    )(x, w_qkv, b_qkv.reshape(1, N3))


def linear_res_ln(x, w, b, residual, gamma, beta, eps=1e-12):
    M, K = x.shape
    N = w.shape[1]
    TM = _pick_tile(M, _CONST["tm"], 16)
    grid = (M // TM,)
    return pl.pallas_call(
        functools.partial(_linear_res_ln_kernel, eps=eps),
        out_shape=jax.ShapeDtypeStruct((M, N), ACT_DTYPE),
        grid=grid,
        in_specs=[
            pl.BlockSpec((TM, K), lambda i: (i, 0)),
            pl.BlockSpec((K, N), lambda i: (0, 0)),
            pl.BlockSpec((1, N), lambda i: (0, 0)),
            pl.BlockSpec((TM, N), lambda i: (i, 0)),
            pl.BlockSpec((1, N), lambda i: (0, 0)),
            pl.BlockSpec((1, N), lambda i: (0, 0)),
        ],
        out_specs=pl.BlockSpec((TM, N), lambda i: (i, 0)),
        compiler_params=pltpu.CompilerParams(
            dimension_semantics=("parallel",),
            vmem_limit_bytes=_CONST["vmem_limit"]),
    )(x, w, b.reshape(1, N), residual, gamma.reshape(1, N), beta.reshape(1, N))


def embed_add_ln(tok, pos, gamma, beta, eps=1e-12):
    B, S, H = tok.shape
    TS = _pick_tile(S, 512, 16)
    grid = (B, S // TS)
    return pl.pallas_call(
        functools.partial(_embed_ln_kernel, eps=eps),
        out_shape=jax.ShapeDtypeStruct((B, S, H), ACT_DTYPE),
        grid=grid,
        in_specs=[
            pl.BlockSpec((1, TS, H), lambda b, si: (b, si, 0)),
            pl.BlockSpec((TS, H), lambda b, si: (si, 0)),
            pl.BlockSpec((1, H), lambda b, si: (0, 0)),
            pl.BlockSpec((1, H), lambda b, si: (0, 0)),
        ],
        out_specs=pl.BlockSpec((1, TS, H), lambda b, si: (b, si, 0)),
        compiler_params=pltpu.CompilerParams(
            dimension_semantics=("parallel", "parallel"),
            vmem_limit_bytes=_CONST["vmem_limit"]),
    )(tok, pos, gamma.reshape(1, H), beta.reshape(1, H))


def attention(q, k, v, add_mask, B, S):
    """q/k/v: head-major (heads, B*S, Dh); add_mask: (B, 1, S).  Returns (B*S, H)."""
    heads, M, Dh = q.shape
    H = heads * Dh
    TQ = _pick_tile(S, _CONST["tq"], 16)
    TK = _pick_tile(S, _CONST["tk"], 128)
    qtiles = S // TQ
    ktiles = S // TK
    # Fused (B * q_tiles) parallel axis keeps both v7x TensorCores busy even for odd/small B.
    grid = (B * qtiles, ktiles)
    return pl.pallas_call(
        _flash_attn_kernel,
        out_shape=jax.ShapeDtypeStruct((M, H), ACT_DTYPE),
        grid=grid,
        in_specs=[
            pl.BlockSpec((heads, TQ, Dh), lambda bq, ki: (0, bq, 0)),
            pl.BlockSpec((heads, TK, Dh),
                         lambda bq, ki: (0, (bq // qtiles) * ktiles + ki, 0)),
            pl.BlockSpec((heads, TK, Dh),
                         lambda bq, ki: (0, (bq // qtiles) * ktiles + ki, 0)),
            pl.BlockSpec((1, 1, TK), lambda bq, ki: (bq // qtiles, 0, ki)),
        ],
        out_specs=pl.BlockSpec((TQ, H), lambda bq, ki: (bq, 0)),
        scratch_shapes=[
            pltpu.VMEM((heads, TQ, 1), jnp.float32),    # m (running max)
            pltpu.VMEM((heads, TQ, 1), jnp.float32),    # l (running denom)
            pltpu.VMEM((heads, TQ, Dh), jnp.float32),   # acc
        ],
        compiler_params=pltpu.CompilerParams(
            dimension_semantics=("parallel", "arbitrary"),
            vmem_limit_bytes=_CONST["vmem_limit"]),
    )(q, k, v, add_mask)


def classifier_head(cls, pool_w, pool_b, cls_w_pad, cls_b_pad):
    B, H = cls.shape
    NP = cls_w_pad.shape[1]
    return pl.pallas_call(
        _head_kernel,
        out_shape=jax.ShapeDtypeStruct((B, NP), jnp.float32),
        grid=(1,),
        in_specs=[
            pl.BlockSpec((B, H), lambda i: (0, 0)),
            pl.BlockSpec((H, H), lambda i: (0, 0)),
            pl.BlockSpec((1, H), lambda i: (0, 0)),
            pl.BlockSpec((H, NP), lambda i: (0, 0)),
            pl.BlockSpec((1, NP), lambda i: (0, 0)),
        ],
        out_specs=pl.BlockSpec((B, NP), lambda i: (0, 0)),
        compiler_params=pltpu.CompilerParams(dimension_semantics=("arbitrary",)),
    )(cls, pool_w, pool_b.reshape(1, H), cls_w_pad, cls_b_pad.reshape(1, NP))


# ----------------------------- Model (glue + params) -----------------------------

def _w(key, shape, scale=0.02):
    return (scale * jax.random.normal(key, shape, dtype=jnp.float32)).astype(ACT_DTYPE)


def init_params(key, vocab=100, hidden=32, heads=4, inter=64,
                n_layers=2, max_pos=64, num_labels=1):
    keys = jax.random.split(key, 8 + n_layers)
    cls_w = 0.02 * jax.random.normal(keys[3], (hidden, num_labels), dtype=jnp.float32)
    cls_w_pad = jnp.zeros((hidden, _LOGIT_PAD), jnp.float32)
    cls_w_pad = cls_w_pad.at[:, :num_labels].set(cls_w)       # keep f32 (head stays f32)
    params = {
        "heads": heads,
        "num_labels": num_labels,
        "tok_emb": _w(keys[0], (vocab, hidden)),
        "pos_emb": _w(keys[1], (max_pos, hidden)),
        "emb_ln_g": jnp.ones((hidden,), jnp.float32),
        "emb_ln_b": jnp.zeros((hidden,), jnp.float32),
        "pool_w": _w(keys[2], (hidden, hidden)),
        "pool_b": jnp.zeros((hidden,), jnp.float32),
        "cls_w_pad": cls_w_pad,
        "cls_b_pad": jnp.zeros((_LOGIT_PAD,), jnp.float32),
        "layers": [],
    }
    for li in range(n_layers):
        lk = jax.random.split(keys[8 + li], 6)
        wq = _w(lk[0], (hidden, hidden))
        wk = _w(lk[1], (hidden, hidden))
        wv = _w(lk[2], (hidden, hidden))
        params["layers"].append({
            "w_qkv": jnp.concatenate([wq, wk, wv], axis=1),     # fused (H, 3H)
            "b_qkv": jnp.zeros((3 * hidden,), jnp.float32),
            "wo": _w(lk[3], (hidden, hidden)), "bo": jnp.zeros((hidden,), jnp.float32),
            "ln1_g": jnp.ones((hidden,), jnp.float32), "ln1_b": jnp.zeros((hidden,), jnp.float32),
            "w1": _w(lk[4], (hidden, inter)), "b1": jnp.zeros((inter,), jnp.float32),
            "w2": _w(lk[5], (inter, hidden)), "b2": jnp.zeros((hidden,), jnp.float32),
            "ln2_g": jnp.ones((hidden,), jnp.float32), "ln2_b": jnp.zeros((hidden,), jnp.float32),
        })
    return params


def reranker_forward(params, input_ids, attention_mask):
    """Equivalent of RerankerForInference.forward(batch) -> logits (B, num_labels)."""
    B, S = input_ids.shape
    H = params["tok_emb"].shape[1]
    heads = params["heads"]
    M = B * S

    # Embedding lookup (gather) is glue in plain JAX; pos-add + LN fused in one kernel.
    # TODO(synk): token_type embeddings omitted (synthetic encoder, not a real HF checkpoint).
    tok = params["tok_emb"][input_ids]                           # (B, S, H)
    x = embed_add_ln(tok, params["pos_emb"][:S],
                     params["emb_ln_g"], params["emb_ln_b"]).reshape(M, H)

    add_mask = ((1.0 - attention_mask.astype(jnp.float32)) * -1e9).reshape(B, 1, S)

    for lp in params["layers"]:
        # --- multi-head self-attention (fused QKV -> head-major, flash kernel) ---
        q, k, v = qkv_proj(x, lp["w_qkv"], lp["b_qkv"], H, heads)  # (heads, M, Dh) each
        o = attention(q, k, v, add_mask, B, S)                     # (M, H)
        # output projection + residual + LayerNorm fused in one kernel
        x = linear_res_ln(o, lp["wo"], lp["bo"], x, lp["ln1_g"], lp["ln1_b"])

        # --- feed-forward (exact GELU) + fused residual + LayerNorm ---
        h = linear(x, lp["w1"], lp["b1"], act="gelu")
        x = linear_res_ln(h, lp["w2"], lp["b2"], x, lp["ln2_g"], lp["ln2_b"])

    cls = x.reshape(B, S, H)[:, 0, :]                      # [CLS] pooling (glue)
    logits_pad = classifier_head(cls, params["pool_w"], params["pool_b"],
                                 params["cls_w_pad"], params["cls_b_pad"])
    return logits_pad[:, :params["num_labels"]]            # (B, num_labels)


if __name__ == "__main__":
    key = jax.random.PRNGKey(0)
    kp, kd = jax.random.split(key)

    B, S, VOCAB = 2, 8, 100
    params = init_params(kp, vocab=VOCAB, hidden=32, heads=4, inter=64,
                         n_layers=2, max_pos=64, num_labels=1)

    input_ids = jax.random.randint(kd, (B, S), 0, VOCAB, dtype=jnp.int32)
    attention_mask = jnp.ones((B, S), dtype=jnp.int32).at[1, 6:].set(0)  # simulate padding

    logits = reranker_forward(params, input_ids, attention_mask)
    jax.block_until_ready(logits)
    assert logits.shape == (B, 1)
    print("KERNEL_OK")
</pallas_src>

<mosaic_0001>
module attributes {stable_mosaic.version = 11 : i64} {
  func.func @_embed_ln_kernel(%arg0: i32, %arg1: i32, %arg2: memref<1x8x32xbf16, #tpu.memory_space<vmem>>, %arg3: memref<8x32xbf16, #tpu.memory_space<vmem>>, %arg4: memref<1x32xf32, #tpu.memory_space<vmem>>, %arg5: memref<1x32xf32, #tpu.memory_space<vmem>>, %arg6: memref<1x8x32xbf16, #tpu.memory_space<vmem>>) attributes {dimension_semantics = [#tpu.dimension_semantics<parallel>, #tpu.dimension_semantics<parallel>], iteration_bounds = array<i64: 2, 1>, scalar_prefetch = 0 : i64, scratch_operands = 0 : i64, tpu.core_type = #tpu.core_type<tc>, window_params = [{transform_indices = @transform_0, window_bounds = array<i64: 1, 8, 32>}, {transform_indices = @transform_1, window_bounds = array<i64: 8, 32>}, {pipeline_mode = #tpu.pipeline_mode<synchronous>, transform_indices = @transform_2, window_bounds = array<i64: 1, 32>}, {pipeline_mode = #tpu.pipeline_mode<synchronous>, transform_indices = @transform_3, window_bounds = array<i64: 1, 32>}, {transform_indices = @transform_4, window_bounds = array<i64: 1, 8, 32>}]} {
    %c0 = arith.constant 0 : index
    %c0_0 = arith.constant 0 : index
    %c0_1 = arith.constant 0 : index
    %0 = vector.load %arg2[%c0, %c0_0, %c0_1] : memref<1x8x32xbf16, #tpu.memory_space<vmem>>, vector<1x8x32xbf16>
    %1 = vector.shape_cast %0 : vector<1x8x32xbf16> to vector<8x32xbf16>
    %2 = arith.extf %1 : vector<8x32xbf16> to vector<8x32xf32>
    %c0_2 = arith.constant 0 : index
    %c0_3 = arith.constant 0 : index
    %3 = vector.load %arg3[%c0_2, %c0_3] : memref<8x32xbf16, #tpu.memory_space<vmem>>, vector<8x32xbf16>
    %4 = arith.extf %3 : vector<8x32xbf16> to vector<8x32xf32>
    %5 = arith.addf %2, %4 : vector<8x32xf32>
    %cst = arith.constant dense<0.000000e+00> : vector<8xf32>
    %6 = vector.multi_reduction <add>, %5, %cst [1] : vector<8x32xf32> to vector<8xf32>
    %7 = vector.shape_cast %6 : vector<8xf32> to vector<8x1xf32>
    %cst_4 = arith.constant 3.200000e+01 : f32
    %8 = vector.broadcast %cst_4 : f32 to vector<8x1xf32>
    %9 = arith.divf %7, %8 : vector<8x1xf32>
    %10 = vector.broadcast %9 : vector<8x1xf32> to vector<8x32xf32>
    %11 = arith.subf %5, %10 : vector<8x32xf32>
    %12 = arith.mulf %11, %11 : vector<8x32xf32>
    %cst_5 = arith.constant dense<0.000000e+00> : vector<8xf32>
    %13 = vector.multi_reduction <add>, %12, %cst_5 [1] : vector<8x32xf32> to vector<8xf32>
    %14 = vector.shape_cast %13 : vector<8xf32> to vector<8x1xf32>
    %cst_6 = arith.constant 3.200000e+01 : f32
    %15 = vector.broadcast %cst_6 : f32 to vector<8x1xf32>
    %16 = arith.divf %14, %15 : vector<8x1xf32>
    %cst_7 = arith.constant 9.99999996E-13 : f32
    %17 = vector.broadcast %cst_7 : f32 to vector<8x1xf32>
    %18 = arith.addf %16, %17 : vector<8x1xf32>
    %19 = math.rsqrt %18 : vector<8x1xf32>
    %20 = vector.broadcast %19 : vector<8x1xf32> to vector<8x32xf32>
    %21 = arith.mulf %11, %20 : vector<8x32xf32>
    %c0_8 = arith.constant 0 : index
    %c0_9 = arith.constant 0 : index
    %22 = vector.load %arg4[%c0_8, %c0_9] : memref<1x32xf32, #tpu.memory_space<vmem>>, vector<1x32xf32>
    %23 = vector.broadcast %22 : vector<1x32xf32> to vector<8x32xf32>
    %24 = arith.mulf %21, %23 : vector<8x32xf32>
    %c0_10 = arith.constant 0 : index
    %c0_11 = arith.constant 0 : index
    %25 = vector.load %arg5[%c0_10, %c0_11] : memref<1x32xf32, #tpu.memory_space<vmem>>, vector<1x32xf32>
    %26 = vector.broadcast %25 : vector<1x32xf32> to vector<8x32xf32>
    %27 = arith.addf %24, %26 : vector<8x32xf32>
    %28 = arith.truncf %27 : vector<8x32xf32> to vector<8x32xbf16>
    %c0_12 = arith.constant 0 : index
    %c0_13 = arith.constant 0 : index
    %c0_14 = arith.constant 0 : index
    %29 = vector.load %arg6[%c0_12, %c0_13, %c0_14] : memref<1x8x32xbf16, #tpu.memory_space<vmem>>, vector<1x8x32xbf16>
    %30 = vector.shape_cast %29 : vector<1x8x32xbf16> to vector<8x32xbf16>
    %31 = vector.shape_cast %28 : vector<8x32xbf16> to vector<1x8x32xbf16>
    tpu.vector_store %arg6[%c0_12, %c0_13, %c0_14], %31 {strides = array<i32>} : memref<1x8x32xbf16, #tpu.memory_space<vmem>>, vector<1x8x32xbf16>,
    return
  }
  func.func @transform_0(%arg0: i32, %arg1: i32) -> (i32, i32, i32) {
    %c0_i32 = arith.constant 0 : i32
    %c0_i32_0 = arith.constant 0 : i32
    return %arg0, %arg1, %c0_i32 : i32, i32, i32
  }
  func.func @transform_1(%arg0: i32, %arg1: i32) -> (i32, i32) {
    %c0_i32 = arith.constant 0 : i32
    %c0_i32_0 = arith.constant 0 : i32
    return %arg1, %c0_i32 : i32, i32
  }
  func.func @transform_2(%arg0: i32, %arg1: i32) -> (i32, i32) {
    %c0_i32 = arith.constant 0 : i32
    %c0_i32_0 = arith.constant 0 : i32
    %c0_i32_1 = arith.constant 0 : i32
    return %c0_i32, %c0_i32_0 : i32, i32
  }
  func.func @transform_3(%arg0: i32, %arg1: i32) -> (i32, i32) {
    %c0_i32 = arith.constant 0 : i32
    %c0_i32_0 = arith.constant 0 : i32
    %c0_i32_1 = arith.constant 0 : i32
    return %c0_i32, %c0_i32_0 : i32, i32
  }
  func.func @transform_4(%arg0: i32, %arg1: i32) -> (i32, i32, i32) {
    %c0_i32 = arith.constant 0 : i32
    %c0_i32_0 = arith.constant 0 : i32
    return %arg0, %arg1, %c0_i32 : i32, i32, i32
  }
}

</mosaic_0001>

<llo_original>
// kernel: tpu_custom_call.1
$region0: #{tpu_custom_call.1}
  #allocation0 [shape = 'u32[]', space=smem, size = 0x4, offset = 0x4, fixed_abs, tag = 'smem constant byte address 0x4 - core index']
  #allocation1 [shape = 'u32[144,128]{1,0:T(1,128)}', space=vmem, size = 0x12000, scoped, tag = 'internal scratch']
  %s0 = inlined_call_operand.hbm [shape: bf16[2,8,32], index: 0, kind: input, shape index: {}]
  %s1 = inlined_call_operand.hbm [shape: bf16[8,32], index: 1, kind: input, shape index: {}]
  %s2 = inlined_call_operand.vmem [shape: f32[1,32], index: 2, kind: input, shape index: {}]
  %s3 = inlined_call_operand.vmem [shape: f32[1,32], index: 3, kind: input, shape index: {}]
  %s4 = inlined_call_operand.hbm [shape: bf16[2,8,32], index: 4, kind: output, shape index: {}]
  %s5 = sld [smem:[#allocation0]]
  $region57: #{tpu_custom_call.1} parent=0
    _
  %s7 = ssub.s32 1, %s5
  %s8 = scalar_select 0, %s7, %s5
  $region1: #{tpu_custom_call.1} parent=0
    #allocation2 [shape = 'u8[4096]{0}', space=vmem, size = 0x1000, scoped, tag = 'input window, operand 0']
    #allocation3 [shape = 's32[2]{0}', space=sflag, size = 0x8, scoped, tag = 'scoped memory for tpu_custom_call.1']
    #allocation4 [shape = 's32[2]{0}', space=sflag, size = 0x8, scoped, tag = 'scoped memory for tpu_custom_call.1']
    #allocation5 [shape = 'u8[2048]{0}', space=vmem, size = 0x800, scoped, tag = 'input window, operand 1, single buffered']
    #allocation6 [shape = 's32[1]{0}', space=sflag, size = 0x4, scoped, tag = 'scoped memory for tpu_custom_call.1']
    #allocation7 [shape = 'u8[4096]{0}', space=vmem, size = 0x1000, scoped, tag = 'output window, operand 0']
    %9 = vsyncpa [#allocation3], 0
    %s10 = scalar_lea.sflag [#allocation3], 1
    %11 = vsyncpa %s10, 0
    %12 = vsyncpa [#allocation6], 0
    %13 = vsyncpa [#allocation4], 0
    %s14 = scalar_lea.sflag [#allocation4], 1
    %15 = vsyncpa %s14, 0
    loop: start=0, step=1, limit=4
    $region2: #{tpu_custom_call.1} parent=1 // loop_pre_header
      _
    $region3: #{tpu_custom_call.1} parent=1 // loop_header
      %s17 = sphi 0, %s21
      %p18 = scmp.ge.s32.totalorder %s17, 4
      %s24 = sphi 0, %s36
      %s25 = sphi 0, %s32
      %s26 = sphi 0, %s24
      %s27 = sphi 0, %s25
      %s28 = sphi 0, %s26
      %s29 = sphi 0, %s27
      %s41 = sphi 0, %s43
      %s44 = sphi 0, %s41
      %s45 = sphi 0, %s44
      %s61 = sphi 0, %s45
      %s67 = sphi 0, %s69
      %s70 = sphi 0, %s67
      %s71 = sphi 0, %s70
      %s87 = sphi 0, %s71
      %s91 = sphi 0, %s91
      %s93 = sphi 0, %s91
      %s94 = sphi 0, %s93
      %s108 = sphi 0, %s94
      %s112 = sphi 0, %s112
      %s114 = sphi 0, %s112
      %s115 = sphi 0, %s114
      %s129 = sphi 0, %s115
      %s137 = sphi 0, %s139
      %s140 = sphi 0, %s137
      %s141 = sphi 0, %s140
      %s157 = sphi 0, %s141
    $region4: #{tpu_custom_call.1} parent=1 // loop_header_branch
      %20 = sbr.rel (%p18) target = $region8
    $region5: #{tpu_custom_call.1} parent=1 // loop_body
      %s22 = ssub.s32 %s17, 1
      %s23 = ssub.s32 %s17, 2
      %s30 = sadd.s32 1, %s25
      %p31 = scmp.ge.s32.totalorder %s30, 1
      %s32 = scalar_select %p31, 0, %s30
      %s33 = sadd.s32 1, %s24
      %s34 = scalar_select %p31, %s33, %s24
      %p35 = scmp.ge.s32.totalorder %s34, 2
      %s36 = scalar_select %p35, 0, %s34
      %s37 = ssub.s32 %s24, %s36
      %s38 = ssub.s32 %s25, %s32
      %s39 = sor.u32 %s37, %s38
      %p40 = scmp.eq.s32.totalorder %s39, 0
      %s42 = sadd.s32 %s41, 1
      %s43 = scalar_select %p40, %s41, %s42
      %p46 = pneg %p40
      %p47 = scmp.eq.s32.totalorder %s17, 1
      %p48 = por %p46, %p47
      %p49 = scmp.ne.s32.totalorder %s41, %s44
      %p50 = scmp.eq.s32.totalorder %s17, 0
      %p51 = por %p49, %p50
      %p52 = scmp.ne.s32.totalorder %s41, %s44
      %p53 = scmp.eq.s32.totalorder %s22, 1
      %p54 = por %p52, %p53
      %p55 = scmp.ne.s32.totalorder %s44, %s45
      %p56 = scmp.eq.s32.totalorder %s22, 0
      %p57 = por %p55, %p56
      %p58 = scmp.ne.s32.totalorder %s44, %s45
      %p59 = scmp.eq.s32.totalorder %s23, 1
      %p60 = por %p58, %p59
      %p62 = scmp.ne.s32.totalorder %s45, %s61
      %p63 = scmp.eq.s32.totalorder %s23, 0
      %p64 = por %p62, %p63
      %s65 = ssub.s32 %s25, %s32
      %p66 = scmp.eq.s32.totalorder %s65, 0
      %s68 = sadd.s32 %s67, 1
      %s69 = scalar_select %p66, %s67, %s68
      %p72 = pneg %p66
      %p73 = scmp.eq.s32.totalorder %s17, 1
      %p74 = por %p72, %p73
      %p75 = scmp.ne.s32.totalorder %s67, %s70
      %p76 = scmp.eq.s32.totalorder %s17, 0
      %p77 = por %p75, %p76
      %p78 = scmp.ne.s32.totalorder %s67, %s70
      %p79 = scmp.eq.s32.totalorder %s22, 1
      %p80 = por %p78, %p79
      %p81 = scmp.ne.s32.totalorder %s70, %s71
      %p82 = scmp.eq.s32.totalorder %s22, 0
      %p83 = por %p81, %p82
      %p84 = scmp.ne.s32.totalorder %s70, %s71
      %p85 = scmp.eq.s32.totalorder %s23, 1
      %p86 = por %p84, %p85
      %p88 = scmp.ne.s32.totalorder %s71, %s87
      %p89 = scmp.eq.s32.totalorder %s23, 0
      %p90 = por %p88, %p89
      %s92 = sadd.s32 %s91, 1
      %p95 = scmp.eq.s32.totalorder %s17, 1
      %p96 = scmp.ne.s32.totalorder %s91, %s93
      %p97 = scmp.eq.s32.totalorder %s17, 0
      %p98 = por %p96, %p97
      %p99 = scmp.ne.s32.totalorder %s91, %s93
      %p100 = scmp.eq.s32.totalorder %s22, 1
      %p101 = por %p99, %p100
      %p102 = scmp.ne.s32.totalorder %s93, %s94
      %p103 = scmp.eq.s32.totalorder %s22, 0
      %p104 = por %p102, %p103
      %p105 = scmp.ne.s32.totalorder %s93, %s94
      %p106 = scmp.eq.s32.totalorder %s23, 1
      %p107 = por %p105, %p106
      %p109 = scmp.ne.s32.totalorder %s94, %s108
      %p110 = scmp.eq.s32.totalorder %s23, 0
      %p111 = por %p109, %p110
      %s113 = sadd.s32 %s112, 1
      %p116 = scmp.eq.s32.totalorder %s17, 1
      %p117 = scmp.ne.s32.totalorder %s112, %s114
      %p118 = scmp.eq.s32.totalorder %s17, 0
      %p119 = por %p117, %p118
      %p120 = scmp.ne.s32.totalorder %s112, %s114
      %p121 = scmp.eq.s32.totalorder %s22, 1
      %p122 = por %p120, %p121
      %p123 = scmp.ne.s32.totalorder %s114, %s115
      %p124 = scmp.eq.s32.totalorder %s22, 0
      %p125 = por %p123, %p124
      %p126 = scmp.ne.s32.totalorder %s114, %s115
      %p127 = scmp.eq.s32.totalorder %s23, 1
      %p128 = por %p126, %p127
      %p130 = scmp.ne.s32.totalorder %s115, %s129
      %p131 = scmp.eq.s32.totalorder %s23, 0
      %p132 = por %p130, %p131
      %s133 = ssub.s32 %s24, %s36
      %s134 = ssub.s32 %s25, %s32
      %s135 = sor.u32 %s133, %s134
      %p136 = scmp.eq.s32.totalorder %s135, 0
      %s138 = sadd.s32 %s137, 1
      %s139 = scalar_select %p136, %s137, %s138
      %p142 = pneg %p136
      %p143 = scmp.eq.s32.totalorder %s17, 1
      %p144 = por %p142, %p143
      %p145 = scmp.ne.s32.totalorder %s137, %s140
      %p146 = scmp.eq.s32.totalorder %s17, 0
      %p147 = por %p145, %p146
      %p148 = scmp.ne.s32.totalorder %s137, %s140
      %p149 = scmp.eq.s32.totalorder %s22, 1
      %p150 = por %p148, %p149
      %p151 = scmp.ne.s32.totalorder %s140, %s141
      %p152 = scmp.eq.s32.totalorder %s22, 0
      %p153 = por %p151, %p152
      %p154 = scmp.ne.s32.totalorder %s140, %s141
      %p155 = scmp.eq.s32.totalorder %s23, 1
      %p156 = por %p154, %p155
      %p158 = scmp.ne.s32.totalorder %s141, %s157
      %p159 = scmp.eq.s32.totalorder %s23, 0
      %p160 = por %p158, %p159
      %p161 = scmp.le.s32.totalorder 1, %s17
      %p162 = scmp.lt.s32.totalorder %s17, 3
      %p163 = pnand %p161, %p162
      %p164 = pneg %p163
      // Predicated region
      $region9: #{tpu_custom_call.1} parent=5 // pred_check
        _
      $region10: #{tpu_custom_call.1} parent=5 // pred_check_branch
        %166 = sbr.rel (%p163) target = $region12
      $region11: #{tpu_custom_call.1} parent=5 // pred_region
        %s167 = ssub.s32 %s17, 1
        // Predicated region
        $region13: #{tpu_custom_call.1} parent=11 // pred_check
          %p168 = pneg %p83
        $region14: #{tpu_custom_call.1} parent=11 // pred_check_branch
          %170 = sbr.rel (%p168) target = $region16
        $region15: #{tpu_custom_call.1} parent=11 // pred_region
          %s172 = ssub.s32 64, 64
          %173 = vsyncadd [#allocation6], %s172
          %s174 = smul.addr %s27, 64
          %s175 = scalar_lea.hbm %s1, %s174
          %s177 = sshll.u32 [#allocation5], 4
          %s178 = int_to_ptr.vmem [resolvable:$true] %s177
          %180 = dma.hbm_to_vmem [thread:$0]  %s175, 64, %s178, [#allocation6]
        $region16: #{tpu_custom_call.1} parent=11 // pred_fallthru
          _
        // Predicated region
        $region17: #{tpu_custom_call.1} parent=11 // pred_check
          %p181 = pneg %p104
        $region18: #{tpu_custom_call.1} parent=11 // pred_check_branch
          %183 = sbr.rel (%p181) target = $region20
        $region19: #{tpu_custom_call.1} parent=11 // pred_region
          _
        $region20: #{tpu_custom_call.1} parent=11 // pred_fallthru
          _
        // Predicated region
        $region21: #{tpu_custom_call.1} parent=11 // pred_check
          %p184 = pneg %p125
        $region22: #{tpu_custom_call.1} parent=11 // pred_check_branch
          %186 = sbr.rel (%p184) target = $region24
        $region23: #{tpu_custom_call.1} parent=11 // pred_region
          _
        $region24: #{tpu_custom_call.1} parent=11 // pred_fallthru
          _
      $region12: #{tpu_custom_call.1} parent=5 // pred_fallthru
        _
      %p187 = scmp.lt.s32.totalorder %s17, 2
      // Predicated region
      $region25: #{tpu_custom_call.1} parent=5 // pred_check
        %p188 = pneg %p187
      $region26: #{tpu_custom_call.1} parent=5 // pred_check_branch
        %190 = sbr.rel (%p188) target = $region28
      $region27: #{tpu_custom_call.1} parent=5 // pred_region
        // Predicated region
        $region29: #{tpu_custom_call.1} parent=27 // pred_check
          %p191 = pneg %p51
        $region30: #{tpu_custom_call.1} parent=27 // pred_check_branch
          %193 = sbr.rel (%p191) target = $region32
        $region31: #{tpu_custom_call.1} parent=27 // pred_region
          %s194 = sand.u32 %s41, 1
          %s195 = scalar_lea.sflag [#allocation3], %s194
          %s196 = sand.u32 %s41, 1
          %s197 = smul.addr %s196, 4
          %s198 = scalar_lea.vmem [#allocation2], %s197
          %s200 = ssub.s32 64, 64
          %201 = vsyncadd %s195, %s200
          %s202 = sadd.s32 %s25, %s24
          %s203 = smul.addr %s202, 64
          %s204 = scalar_lea.hbm %s0, %s203
          %s206 = sshll.u32 %s198, 4
          %s207 = int_to_ptr.vmem [resolvable:$true] %s206
          %209 = dma.hbm_to_vmem [thread:$0]  %s204, 64, %s207, %s195
        $region32: #{tpu_custom_call.1} parent=27 // pred_fallthru
          _
      $region28: #{tpu_custom_call.1} parent=5 // pred_fallthru
        _
      %p210 = scmp.le.s32.totalorder 1, %s17
      %p211 = scmp.lt.s32.totalorder %s17, 3
      %p212 = pnand %p210, %p211
      %p213 = pneg %p212
      // Predicated region
      $region33: #{tpu_custom_call.1} parent=5 // pred_check
        _
      $region34: #{tpu_custom_call.1} parent=5 // pred_check_branch
        %215 = sbr.rel (%p212) target = $region36
      $region35: #{tpu_custom_call.1} parent=5 // pred_region
        %s216 = ssub.s32 %s17, 1
        %s217 = sand.u32 %s44, 1
        %s218 = scalar_lea.sflag [#allocation3], %s217
        %s219 = sand.u32 %s44, 1
        %s220 = smul.addr %s219, 4
        %s221 = scalar_lea.vmem [#allocation2], %s220
        // Predicated region
        $region37: #{tpu_custom_call.1} parent=35 // pred_check
          %p222 = pneg %p57
        $region38: #{tpu_custom_call.1} parent=35 // pred_check_branch
          %224 = sbr.rel (%p222) target = $region40
        $region39: #{tpu_custom_call.1} parent=35 // pred_region
          %225 = dma.done %s218, 64
        $region40: #{tpu_custom_call.1} parent=35 // pred_fallthru
          _
        // Predicated region
        $region41: #{tpu_custom_call.1} parent=35 // pred_check
          %p226 = pneg %p83
        $region42: #{tpu_custom_call.1} parent=35 // pred_check_branch
          %228 = sbr.rel (%p226) target = $region44
        $region43: #{tpu_custom_call.1} parent=35 // pred_region
          %229 = dma.done [#allocation6], 64
        $region44: #{tpu_custom_call.1} parent=35 // pred_fallthru
          _
        %s230 = sand.u32 %s44, 1
        %s231 = scalar_lea.sflag [#allocation3], %s230
        %s232 = sand.u32 %s44, 1
        %s233 = smul.addr %s232, 4
        %s234 = scalar_lea.vmem [#allocation2], %s233
        %p235 = pneg %p57
        %p236 = pneg %p54
        %p237 = pneg %p83
        %p238 = pneg %p80
        %p239 = pneg %p104
        %p240 = pneg %p101
        %p241 = pneg %p125
        %p242 = pneg %p122
        %p243 = pneg %p153
        %p244 = pneg %p150
        %s245 = sand.u32 %s140, 1
        %s246 = scalar_lea.sflag [#allocation4], %s245
        %s247 = sand.u32 %s140, 1
        %s248 = smul.addr %s247, 4
        %s249 = scalar_lea.vmem [#allocation7], %s248
        %v250 = vld [vmem:[%s221] sm:$0xf]
        %v251 = vunpack.c.l.bf16 %v250
        %v252 = vld [vmem:[#allocation5] sm:$0xf]
        %v253 = vunpack.c.l.bf16 %v252
        %v254 = vadd.f32 %v251, %v253
        %vm255 = vcmask 261120
        %v256 = vsel %vm255, %v254, 0.0
        %257 = vadd.xlane.f32.xlu0 %v256
        %v258 = vpop.xlane.xlu0 %257
        %v259 = vrcp.pop 32.0
        %v260 = vmul.f32 %v258, %v259
        %v261 = vsub.f32 %v254, %v260
        %v262 = vmul.f32 %v261, %v261
        %v263 = vsel %vm255, %v262, 0.0
        %264 = vadd.xlane.f32.xlu0 %v263
        %v265 = vpop.xlane.xlu0 %264
        %v266 = vmul.f32 %v265, %v259
        %v267 = vadd.f32 %v266, 1e-12
        %v268 = vrsqrt.pop %v267
        %v269 = vmul.f32 %v261, %v268
        %v270 = vld [vmem:[%s2] sm:$0x1]
        %v272 = vlaneseq
        %v273 = vshrl.u32 %v272, 7
        %v274 = vsub.s32 0, %v273
        %v275 = vrot.slane %v270, %v274
        %v277 = vmul.f32 %v269, %v275
        %v278 = vld [vmem:[%s3] sm:$0x1]
        %v280 = vlaneseq
        %v281 = vshrl.u32 %v280, 7
        %v282 = vsub.s32 0, %v281
        %v283 = vrot.slane %v278, %v282
        %v285 = vadd.f32 %v277, %v283
        %v286 = vpack.c.bf16 %v285, %v285
        %vm287 = vcmask 257024
        %288 = vst.msk [vmem:[%s249] sm:$0xf] %vm287, %v286
        %s289 = sand.u32 %s140, 1
        %s290 = scalar_lea.sflag [#allocation4], %s289
        %s291 = sand.u32 %s140, 1
        %s292 = smul.addr %s291, 4
        %s293 = scalar_lea.vmem [#allocation7], %s292
        // Predicated region
        $region45: #{tpu_custom_call.1} parent=35 // pred_check
          %p294 = pneg %p150
        $region46: #{tpu_custom_call.1} parent=35 // pred_check_branch
          %296 = sbr.rel (%p294) target = $region48
        $region47: #{tpu_custom_call.1} parent=35 // pred_region
          %s298 = ssub.s32 64, 64
          %299 = vsyncadd %s290, %s298
          %s300 = sadd.s32 %s27, %s26
          %s301 = smul.addr %s300, 64
          %s302 = scalar_lea.hbm %s4, %s301
          %s304 = sshll.u32 %s293, 4
          %s305 = int_to_ptr.vmem [resolvable:$true] %s304
          %307 = dma.vmem_to_hbm [thread:$0]  %s305, 64, %s302, %s290
        $region48: #{tpu_custom_call.1} parent=35 // pred_fallthru
          _
      $region36: #{tpu_custom_call.1} parent=5 // pred_fallthru
        _
      %p308 = scmp.le.s32.totalorder 2, %s17
      // Predicated region
      $region49: #{tpu_custom_call.1} parent=5 // pred_check
        %p309 = pneg %p308
      $region50: #{tpu_custom_call.1} parent=5 // pred_check_branch
        %311 = sbr.rel (%p309) target = $region52
      $region51: #{tpu_custom_call.1} parent=5 // pred_region
        %s312 = ssub.s32 %s17, 2
        // Predicated region
        $region53: #{tpu_custom_call.1} parent=51 // pred_check
          %p313 = pneg %p156
        $region54: #{tpu_custom_call.1} parent=51 // pred_check_branch
          %315 = sbr.rel (%p313) target = $region56
        $region55: #{tpu_custom_call.1} parent=51 // pred_region
          %s316 = sand.u32 %s141, 1
          %s317 = scalar_lea.sflag [#allocation4], %s316
          %s318 = sand.u32 %s141, 1
          %s319 = smul.addr %s318, 4
          %s320 = scalar_lea.vmem [#allocation7], %s319
          %321 = dma.done %s317, 64
        $region56: #{tpu_custom_call.1} parent=51 // pred_fallthru
          _
      $region52: #{tpu_custom_call.1} parent=5 // pred_fallthru
        _
    $region6: #{tpu_custom_call.1} parent=1 // loop_footer
      %s21 = sadd.s32 1, %s17
    $region7: #{tpu_custom_call.1} parent=1 // loop_footer_branch
      %16 = sbr.rel target = $region3
    $region8: #{tpu_custom_call.1} parent=1 // loop_exit
      _
    %322 = vsyncpa [#allocation3], 1
    %s323 = scalar_lea.sflag [#allocation3], 1
    %324 = vsyncpa %s323, 1
    %325 = vsyncpa [#allocation6], 1
    %326 = vsyncpa [#allocation4], 1
    %s327 = scalar_lea.sflag [#allocation4], 1
    %328 = vsyncpa %s327, 1

</llo_original>
